<compile_context>
chip_gen: v5e
topology: v5e:2x2
jax: 0.10.0
libtpu: 0.0.40
codegen_flags: <defaults>
</compile_context>

<pallas_src>
import functools

import jax
import jax.numpy as jnp
from jax.experimental import pallas as pl
from jax.experimental.pallas import tpu as pltpu

LANES = 128
SUBLANES = 8

# sigmoid(-50) == 0 in f32, so with target 0 the modulation factor is exactly 0
# and padded elements contribute exactly 0 to the loss sum.
_PAD_LOGIT = -50.0


def _focal_kernel(pred_ref, tgt_ref, out_ref, *, gamma):
    """One (tile_rows,128) tile of focal loss, accumulated into out_ref (8,128)."""
    i = pl.program_id(1)

    @pl.when(i == 0)
    def _():
        out_ref[...] = jnp.zeros_like(out_ref)

    x = pred_ref[...].astype(jnp.float32)   # logits
    t = tgt_ref[...].astype(jnp.float32)    # targets

    # Stable BCE-with-logits (matches F.binary_cross_entropy_with_logits):
    #   ce = max(x, 0) - x*t + log1p(exp(-|x|))
    e = jnp.exp(-jnp.abs(x))                               # EUP #1
    ce = jnp.maximum(x, 0.0) - x * t + jnp.log1p(e)        # EUP #2 (log1p)
    # sigmoid(x) = 0.5*tanh(0.5*x) + 0.5 — single EUP push, no divide/select.
    p = 0.5 * jnp.tanh(0.5 * x) + 0.5                      # EUP #3
    # 1 - p_t = 1 - (p*t + (1-p)*(1-t)) = p + t - 2*p*t
    u = p + t - 2.0 * p * t
    if float(gamma) == 2.0:
        mod = u * u                       # VPU only — avoid pow (exp+log)
    elif float(gamma) == 1.0:
        mod = u
    else:
        mod = jnp.power(u, jnp.float32(gamma))
    loss = ce * mod

    # (tile_rows,128) -> (8,128) partial sums: sublane-tile-aligned reshape,
    # plain VALU adds, accumulated into the resident output block.
    out_ref[...] += loss.reshape(-1, SUBLANES, LANES).sum(axis=0)


def _device_defaults():
    """(target_tile_rows, vmem_limit_bytes) per TPU generation."""
    try:
        kind = jax.devices()[0].device_kind.lower()
    except Exception:  # pragma: no cover - defensive
        kind = ""
    if "v7" in kind:
        return 4096, 48 * 1024 * 1024    # 64 MiB physical VMEM per TC
    if "v6" in kind:
        return 8192, 96 * 1024 * 1024    # 128 MiB physical VMEM
    if "v5" in kind and ("lite" in kind or "v5e" in kind):
        return 4096, 64 * 1024 * 1024    # scoped default is only 16 MiB
    return 4096, 64 * 1024 * 1024        # conservative default (v4/v5p/unknown)


def focal_loss(y_pred, y, *, alpha=0.25, gamma=2.0,
               target_tile_rows=None, vmem_limit_bytes=None):
    """Pallas implementation of focal.forward (alpha is unused, as in the module)."""
    del alpha  # not used in the reference forward pass
    n_total = int(y_pred.size)
    assert n_total > 0

    d_rows, d_vmem = _device_defaults()
    tile_target = int(target_tile_rows or d_rows)
    tile_target = max(SUBLANES, (tile_target // SUBLANES) * SUBLANES)
    vmem_bytes = int(vmem_limit_bytes or d_vmem)

    xp = y_pred.reshape(-1)
    tp = y.reshape(-1)

    rows_min = pl.cdiv(n_total, LANES)
    rows_aligned = pl.cdiv(rows_min, SUBLANES) * SUBLANES

    # Two-way split along a leading "parallel" grid axis: on v7x the megacore
    # scheduler shards it across both TensorCores; on 1-TC chips it is just a
    # short serial loop.
    n_splits = 2 if rows_aligned >= 2 * SUBLANES else 1
    steps_per_split = max(1, pl.cdiv(rows_aligned, n_splits * tile_target))
    total_steps = n_splits * steps_per_split
    # tile_rows: multiple of 8, <= tile_target, padding < 8 rows per step.
    tile_rows = pl.cdiv(pl.cdiv(rows_aligned, total_steps), SUBLANES) * SUBLANES
    rows_padded = tile_rows * total_steps

    n_pad = rows_padded * LANES - n_total
    if n_pad:
        # Neutral padding: contributes exactly 0 loss, so no in-kernel masking.
        xp = jnp.pad(xp, (0, n_pad), constant_values=_PAD_LOGIT)
        tp = jnp.pad(tp, (0, n_pad), constant_values=0.0)
    xp = xp.reshape(rows_padded, LANES)
    tp = tp.reshape(rows_padded, LANES)

    def in_map(c, i, s=steps_per_split):
        return (c * s + i, 0)

    partials = pl.pallas_call(
        functools.partial(_focal_kernel, gamma=float(gamma)),
        out_shape=jax.ShapeDtypeStruct((n_splits, SUBLANES, LANES), jnp.float32),
        grid=(n_splits, steps_per_split),
        in_specs=[
            pl.BlockSpec((tile_rows, LANES), in_map),
            pl.BlockSpec((tile_rows, LANES), in_map),
        ],
        # One resident (8,128) accumulator block per split (squeezed leading dim).
        out_specs=pl.BlockSpec((None, SUBLANES, LANES), lambda c, i: (c, 0, 0)),
        compiler_params=pltpu.CompilerParams(
            dimension_semantics=("parallel", "arbitrary"),
            vmem_limit_bytes=vmem_bytes),
    )(xp, tp)

    # Tiny (n_splits*1024-element) final reduce + mean in XLA.
    return jnp.sum(partials) / jnp.float32(n_total)


def _focal_ref(y_pred, y, gamma=2.0):
    x = y_pred.astype(jnp.float32)
    t = y.astype(jnp.float32)
    p = jax.nn.sigmoid(x)
    ce = jnp.maximum(x, 0.0) - x * t + jnp.log1p(jnp.exp(-jnp.abs(x)))
    p_t = p * t + (1.0 - p) * (1.0 - t)
    return jnp.mean(ce * (1.0 - p_t) ** gamma)


if __name__ == "__main__":
    key = jax.random.PRNGKey(0)
    k1, k2 = jax.random.split(key)
    # NCHW-like logits and binary targets.
    y_pred = jax.random.normal(k1, (2, 4, 16, 16), dtype=jnp.float32) * 2.0
    y = (jax.random.uniform(k2, (2, 4, 16, 16)) > 0.5).astype(jnp.float32)

    out = focal_loss(y_pred, y, alpha=0.25, gamma=2.0)
    out = jax.block_until_ready(out)

    ref = _focal_ref(y_pred, y, gamma=2.0)
    assert jnp.allclose(out, ref, atol=1e-5, rtol=1e-5), (out, ref)
    print("KERNEL_OK")
</pallas_src>

<mosaic_0001>
module attributes {stable_mosaic.version = 11 : i64} {
  func.func @_focal_kernel(%arg0: i32, %arg1: i32, %arg2: memref<8x128xf32, #tpu.memory_space<vmem>>, %arg3: memref<8x128xf32, #tpu.memory_space<vmem>>, %arg4: memref<1x8x128xf32, #tpu.memory_space<vmem>>) attributes {dimension_semantics = [#tpu.dimension_semantics<parallel>, #tpu.dimension_semantics<arbitrary>], iteration_bounds = array<i64: 2, 1>, scalar_prefetch = 0 : i64, scratch_operands = 0 : i64, tpu.core_type = #tpu.core_type<tc>, window_params = [{transform_indices = @transform_0, window_bounds = array<i64: 8, 128>}, {transform_indices = @transform_1, window_bounds = array<i64: 8, 128>}, {transform_indices = @transform_2, window_bounds = array<i64: 1, 8, 128>}]} {
    %c0_i32 = arith.constant 0 : i32
    %0 = arith.cmpi eq, %arg1, %c0_i32 : i32
    %1 = arith.extui %0 : i1 to i32
    %c0_i32_0 = arith.constant 0 : i32
    %2 = arith.cmpi ne, %1, %c0_i32_0 : i32
    scf.if %2 {
      %cst_16 = arith.constant 0.000000e+00 : f32
      %37 = vector.broadcast %cst_16 : f32 to vector<8x128xf32>
      %c0_17 = arith.constant 0 : index
      %c0_18 = arith.constant 0 : index
      %c0_19 = arith.constant 0 : index
      %38 = vector.load %arg4[%c0_17, %c0_18, %c0_19] : memref<1x8x128xf32, #tpu.memory_space<vmem>>, vector<1x8x128xf32>
      %39 = vector.shape_cast %38 : vector<1x8x128xf32> to vector<8x128xf32>
      %40 = vector.shape_cast %37 : vector<8x128xf32> to vector<1x8x128xf32>
      tpu.vector_store %arg4[%c0_17, %c0_18, %c0_19], %40 {strides = array<i32>} : memref<1x8x128xf32, #tpu.memory_space<vmem>>, vector<1x8x128xf32>,
    } else {
    }
    %c0 = arith.constant 0 : index
    %c0_1 = arith.constant 0 : index
    %3 = vector.load %arg2[%c0, %c0_1] : memref<8x128xf32, #tpu.memory_space<vmem>>, vector<8x128xf32>
    %c0_2 = arith.constant 0 : index
    %c0_3 = arith.constant 0 : index
    %4 = vector.load %arg3[%c0_2, %c0_3] : memref<8x128xf32, #tpu.memory_space<vmem>>, vector<8x128xf32>
    %5 = math.absf %3 : vector<8x128xf32>
    %cst = arith.constant 0.000000e+00 : f32
    %6 = vector.broadcast %cst : f32 to vector<8x128xf32>
    %7 = arith.subf %6, %5 : vector<8x128xf32>
    %8 = math.exp %7 : vector<8x128xf32>
    %cst_4 = arith.constant 0.000000e+00 : f32
    %9 = vector.broadcast %cst_4 : f32 to vector<8x128xf32>
    %10 = arith.maximumf %3, %9 : vector<8x128xf32>
    %11 = arith.mulf %3, %4 : vector<8x128xf32>
    %12 = arith.subf %10, %11 : vector<8x128xf32>
    %13 = math.log1p %8 : vector<8x128xf32>
    %14 = arith.addf %12, %13 : vector<8x128xf32>
    %cst_5 = arith.constant 5.000000e-01 : f32
    %15 = vector.broadcast %cst_5 : f32 to vector<8x128xf32>
    %16 = arith.mulf %15, %3 : vector<8x128xf32>
    %17 = math.tanh %16 : vector<8x128xf32>
    %cst_6 = arith.constant 5.000000e-01 : f32
    %18 = vector.broadcast %cst_6 : f32 to vector<8x128xf32>
    %19 = arith.mulf %18, %17 : vector<8x128xf32>
    %cst_7 = arith.constant 5.000000e-01 : f32
    %20 = vector.broadcast %cst_7 : f32 to vector<8x128xf32>
    %21 = arith.addf %19, %20 : vector<8x128xf32>
    %22 = arith.addf %21, %4 : vector<8x128xf32>
    %cst_8 = arith.constant 2.000000e+00 : f32
    %23 = vector.broadcast %cst_8 : f32 to vector<8x128xf32>
    %24 = arith.mulf %23, %21 : vector<8x128xf32>
    %25 = arith.mulf %24, %4 : vector<8x128xf32>
    %26 = arith.subf %22, %25 : vector<8x128xf32>
    %27 = arith.mulf %26, %26 : vector<8x128xf32>
    %28 = arith.mulf %14, %27 : vector<8x128xf32>
    %c0_9 = arith.constant 0 : index
    %c0_10 = arith.constant 0 : index
    %c0_11 = arith.constant 0 : index
    %29 = vector.load %arg4[%c0_9, %c0_10, %c0_11] : memref<1x8x128xf32, #tpu.memory_space<vmem>>, vector<1x8x128xf32>
    %30 = vector.shape_cast %29 : vector<1x8x128xf32> to vector<8x128xf32>
    %31 = vector.shape_cast %28 : vector<8x128xf32> to vector<1x8x128xf32>
    %cst_12 = arith.constant dense<0.000000e+00> : vector<8x128xf32>
    %32 = vector.multi_reduction <add>, %31, %cst_12 [0] : vector<1x8x128xf32> to vector<8x128xf32>
    %33 = arith.addf %30, %32 : vector<8x128xf32>
    %c0_13 = arith.constant 0 : index
    %c0_14 = arith.constant 0 : index
    %c0_15 = arith.constant 0 : index
    %34 = vector.load %arg4[%c0_13, %c0_14, %c0_15] : memref<1x8x128xf32, #tpu.memory_space<vmem>>, vector<1x8x128xf32>
    %35 = vector.shape_cast %34 : vector<1x8x128xf32> to vector<8x128xf32>
    %36 = vector.shape_cast %33 : vector<8x128xf32> to vector<1x8x128xf32>
    tpu.vector_store %arg4[%c0_13, %c0_14, %c0_15], %36 {strides = array<i32>} : memref<1x8x128xf32, #tpu.memory_space<vmem>>, vector<1x8x128xf32>,
    return
  }
  func.func @transform_0(%arg0: i32, %arg1: i32) -> (i32, i32) {
    %c1_i32 = arith.constant 1 : i32
    %0 = arith.muli %arg0, %c1_i32 : i32
    %1 = arith.addi %0, %arg1 : i32
    %c0_i32 = arith.constant 0 : i32
    %c0_i32_0 = arith.constant 0 : i32
    return %1, %c0_i32 : i32, i32
  }
  func.func @transform_1(%arg0: i32, %arg1: i32) -> (i32, i32) {
    %c1_i32 = arith.constant 1 : i32
    %0 = arith.muli %arg0, %c1_i32 : i32
    %1 = arith.addi %0, %arg1 : i32
    %c0_i32 = arith.constant 0 : i32
    %c0_i32_0 = arith.constant 0 : i32
    return %1, %c0_i32 : i32, i32
  }
  func.func @transform_2(%arg0: i32, %arg1: i32) -> (i32, i32, i32) {
    %c0_i32 = arith.constant 0 : i32
    %c0_i32_0 = arith.constant 0 : i32
    %c0_i32_1 = arith.constant 0 : i32
    return %arg0, %c0_i32, %c0_i32_0 : i32, i32, i32
  }
}

</mosaic_0001>

<llo_original>
// kernel: tpu_custom_call.1
$region0: #{tpu_custom_call.1}
  #allocation0 [shape = 'u32[]', space=smem, size = 0x4, offset = 0x4, fixed_abs, tag = 'smem constant byte address 0x4 - core index']
  #allocation1 [shape = 'u32[72,128]{1,0:T(1,128)}', space=vmem, size = 0x9000, scoped, tag = 'internal scratch']
  %s0 = inlined_call_operand.hbm [shape: f32[16,128], index: 0, kind: input, shape index: {}]
  %s1 = inlined_call_operand.hbm [shape: f32[16,128], index: 1, kind: input, shape index: {}]
  %s2 = inlined_call_operand.hbm [shape: f32[2,8,128], index: 2, kind: output, shape index: {}]
  %s3 = sld [smem:[#allocation0]]
  $region53: #{tpu_custom_call.1} parent=0
    _
  %s5 = ssub.s32 1, %s3
  %s6 = scalar_select 0, %s5, %s3
  $region1: #{tpu_custom_call.1} parent=0
    #allocation2 [shape = 'u8[8192]{0}', space=vmem, size = 0x2000, scoped, tag = 'input window, operand 0']
    #allocation3 [shape = 's32[2]{0}', space=sflag, size = 0x8, scoped, tag = 'scoped memory for tpu_custom_call.1']
    #allocation4 [shape = 's32[2]{0}', space=sflag, size = 0x8, scoped, tag = 'scoped memory for tpu_custom_call.1']
    #allocation5 [shape = 'u8[8192]{0}', space=vmem, size = 0x2000, scoped, tag = 'input window, operand 1']
    #allocation6 [shape = 's32[2]{0}', space=sflag, size = 0x8, scoped, tag = 'scoped memory for tpu_custom_call.1']
    #allocation7 [shape = 'u8[8192]{0}', space=vmem, size = 0x2000, scoped, tag = 'output window, operand 0']
    %7 = vsyncpa [#allocation3], 0
    %s8 = scalar_lea.sflag [#allocation3], 1
    %9 = vsyncpa %s8, 0
    %10 = vsyncpa [#allocation6], 0
    %s11 = scalar_lea.sflag [#allocation6], 1
    %12 = vsyncpa %s11, 0
    %13 = vsyncpa [#allocation4], 0
    %s14 = scalar_lea.sflag [#allocation4], 1
    %15 = vsyncpa %s14, 0
    loop: start=0, step=1, limit=4
    $region2: #{tpu_custom_call.1} parent=1 // loop_pre_header
      _
    $region3: #{tpu_custom_call.1} parent=1 // loop_header
      %s17 = sphi 0, %s21
      %p18 = scmp.ge.s32.totalorder %s17, 4
      %s24 = sphi 0, %s36
      %s25 = sphi 0, %s32
      %s26 = sphi 0, %s24
      %s27 = sphi 0, %s25
      %s28 = sphi 0, %s26
      %s29 = sphi 0, %s27
      %s41 = sphi 0, %s43
      %s44 = sphi 0, %s41
      %s45 = sphi 0, %s44
      %s61 = sphi 0, %s45
      %s69 = sphi 0, %s71
      %s72 = sphi 0, %s69
      %s73 = sphi 0, %s72
      %s89 = sphi 0, %s73
      %s95 = sphi 0, %s97
      %s98 = sphi 0, %s95
      %s99 = sphi 0, %s98
      %s115 = sphi 0, %s99
    $region4: #{tpu_custom_call.1} parent=1 // loop_header_branch
      %20 = sbr.rel (%p18) target = $region8
    $region5: #{tpu_custom_call.1} parent=1 // loop_body
      %s22 = ssub.s32 %s17, 1
      %s23 = ssub.s32 %s17, 2
      %s30 = sadd.s32 1, %s25
      %p31 = scmp.ge.s32.totalorder %s30, 1
      %s32 = scalar_select %p31, 0, %s30
      %s33 = sadd.s32 1, %s24
      %s34 = scalar_select %p31, %s33, %s24
      %p35 = scmp.ge.s32.totalorder %s34, 2
      %s36 = scalar_select %p35, 0, %s34
      %s37 = sadd.s32 %s24, %s25
      %s38 = sadd.s32 %s36, %s32
      %s39 = ssub.s32 %s37, %s38
      %p40 = scmp.eq.s32.totalorder %s39, 0
      %s42 = sadd.s32 %s41, 1
      %s43 = scalar_select %p40, %s41, %s42
      %p46 = pneg %p40
      %p47 = scmp.eq.s32.totalorder %s17, 1
      %p48 = por %p46, %p47
      %p49 = scmp.ne.s32.totalorder %s41, %s44
      %p50 = scmp.eq.s32.totalorder %s17, 0
      %p51 = por %p49, %p50
      %p52 = scmp.ne.s32.totalorder %s41, %s44
      %p53 = scmp.eq.s32.totalorder %s22, 1
      %p54 = por %p52, %p53
      %p55 = scmp.ne.s32.totalorder %s44, %s45
      %p56 = scmp.eq.s32.totalorder %s22, 0
      %p57 = por %p55, %p56
      %p58 = scmp.ne.s32.totalorder %s44, %s45
      %p59 = scmp.eq.s32.totalorder %s23, 1
      %p60 = por %p58, %p59
      %p62 = scmp.ne.s32.totalorder %s45, %s61
      %p63 = scmp.eq.s32.totalorder %s23, 0
      %p64 = por %p62, %p63
      %s65 = sadd.s32 %s24, %s25
      %s66 = sadd.s32 %s36, %s32
      %s67 = ssub.s32 %s65, %s66
      %p68 = scmp.eq.s32.totalorder %s67, 0
      %s70 = sadd.s32 %s69, 1
      %s71 = scalar_select %p68, %s69, %s70
      %p74 = pneg %p68
      %p75 = scmp.eq.s32.totalorder %s17, 1
      %p76 = por %p74, %p75
      %p77 = scmp.ne.s32.totalorder %s69, %s72
      %p78 = scmp.eq.s32.totalorder %s17, 0
      %p79 = por %p77, %p78
      %p80 = scmp.ne.s32.totalorder %s69, %s72
      %p81 = scmp.eq.s32.totalorder %s22, 1
      %p82 = por %p80, %p81
      %p83 = scmp.ne.s32.totalorder %s72, %s73
      %p84 = scmp.eq.s32.totalorder %s22, 0
      %p85 = por %p83, %p84
      %p86 = scmp.ne.s32.totalorder %s72, %s73
      %p87 = scmp.eq.s32.totalorder %s23, 1
      %p88 = por %p86, %p87
      %p90 = scmp.ne.s32.totalorder %s73, %s89
      %p91 = scmp.eq.s32.totalorder %s23, 0
      %p92 = por %p90, %p91
      %s93 = ssub.s32 %s24, %s36
      %p94 = scmp.eq.s32.totalorder %s93, 0
      %s96 = sadd.s32 %s95, 1
      %s97 = scalar_select %p94, %s95, %s96
      %p100 = pneg %p94
      %p101 = scmp.eq.s32.totalorder %s17, 1
      %p102 = por %p100, %p101
      %p103 = scmp.ne.s32.totalorder %s95, %s98
      %p104 = scmp.eq.s32.totalorder %s17, 0
      %p105 = por %p103, %p104
      %p106 = scmp.ne.s32.totalorder %s95, %s98
      %p107 = scmp.eq.s32.totalorder %s22, 1
      %p108 = por %p106, %p107
      %p109 = scmp.ne.s32.totalorder %s98, %s99
      %p110 = scmp.eq.s32.totalorder %s22, 0
      %p111 = por %p109, %p110
      %p112 = scmp.ne.s32.totalorder %s98, %s99
      %p113 = scmp.eq.s32.totalorder %s23, 1
      %p114 = por %p112, %p113
      %p116 = scmp.ne.s32.totalorder %s99, %s115
      %p117 = scmp.eq.s32.totalorder %s23, 0
      %p118 = por %p116, %p117
      %p119 = scmp.le.s32.totalorder 1, %s17
      %p120 = scmp.lt.s32.totalorder %s17, 3
      %p121 = pnand %p119, %p120
      %p122 = pneg %p121
      // Predicated region
      $region9: #{tpu_custom_call.1} parent=5 // pred_check
        _
      $region10: #{tpu_custom_call.1} parent=5 // pred_check_branch
        %124 = sbr.rel (%p121) target = $region12
      $region11: #{tpu_custom_call.1} parent=5 // pred_region
        %s125 = ssub.s32 %s17, 1
      $region12: #{tpu_custom_call.1} parent=5 // pred_fallthru
        _
      %p126 = scmp.lt.s32.totalorder %s17, 2
      // Predicated region
      $region13: #{tpu_custom_call.1} parent=5 // pred_check
        %p127 = pneg %p126
      $region14: #{tpu_custom_call.1} parent=5 // pred_check_branch
        %129 = sbr.rel (%p127) target = $region16
      $region15: #{tpu_custom_call.1} parent=5 // pred_region
        // Predicated region
        $region17: #{tpu_custom_call.1} parent=15 // pred_check
          %p130 = pneg %p51
        $region18: #{tpu_custom_call.1} parent=15 // pred_check_branch
          %132 = sbr.rel (%p130) target = $region20
        $region19: #{tpu_custom_call.1} parent=15 // pred_region
          %s133 = sand.u32 %s41, 1
          %s134 = scalar_lea.sflag [#allocation3], %s133
          %s135 = sand.u32 %s41, 1
          %s136 = smul.addr %s135, 8
          %s137 = scalar_lea.vmem [#allocation2], %s136
          %s138 = sadd.s32 %s24, %s25
          %140 = vsyncadd %s134, 0
          %s141 = smul.addr %s138, 8
          %s142 = scalar_lea.hbm %s0, %s141
          %s144 = sshll.u32 %s142, 4
          %s145 = int_to_ptr.hbm [resolvable:$true] %s144
          %s146 = sshll.u32 %s137, 4
          %s147 = int_to_ptr.vmem [resolvable:$true] %s146
          %149 = dma.hbm_to_vmem [thread:$0]  %s145, 128, %s147, %s134
        $region20: #{tpu_custom_call.1} parent=15 // pred_fallthru
          _
        // Predicated region
        $region21: #{tpu_custom_call.1} parent=15 // pred_check
          %p150 = pneg %p79
        $region22: #{tpu_custom_call.1} parent=15 // pred_check_branch
          %152 = sbr.rel (%p150) target = $region24
        $region23: #{tpu_custom_call.1} parent=15 // pred_region
          %s153 = sand.u32 %s69, 1
          %s154 = scalar_lea.sflag [#allocation6], %s153
          %s155 = sand.u32 %s69, 1
          %s156 = smul.addr %s155, 8
          %s157 = scalar_lea.vmem [#allocation5], %s156
          %s158 = sadd.s32 %s24, %s25
          %160 = vsyncadd %s154, 0
          %s161 = smul.addr %s158, 8
          %s162 = scalar_lea.hbm %s1, %s161
          %s164 = sshll.u32 %s162, 4
          %s165 = int_to_ptr.hbm [resolvable:$true] %s164
          %s166 = sshll.u32 %s157, 4
          %s167 = int_to_ptr.vmem [resolvable:$true] %s166
          %169 = dma.hbm_to_vmem [thread:$0]  %s165, 128, %s167, %s154
        $region24: #{tpu_custom_call.1} parent=15 // pred_fallthru
          _
      $region16: #{tpu_custom_call.1} parent=5 // pred_fallthru
        _
      %p170 = scmp.le.s32.totalorder 1, %s17
      %p171 = scmp.lt.s32.totalorder %s17, 3
      %p172 = pnand %p170, %p171
      %p173 = pneg %p172
      // Predicated region
      $region25: #{tpu_custom_call.1} parent=5 // pred_check
        _
      $region26: #{tpu_custom_call.1} parent=5 // pred_check_branch
        %175 = sbr.rel (%p172) target = $region28
      $region27: #{tpu_custom_call.1} parent=5 // pred_region
        %s176 = ssub.s32 %s17, 1
        %s177 = sand.u32 %s44, 1
        %s178 = scalar_lea.sflag [#allocation3], %s177
        %s179 = sand.u32 %s44, 1
        %s180 = smul.addr %s179, 8
        %s181 = scalar_lea.vmem [#allocation2], %s180
        // Predicated region
        $region29: #{tpu_custom_call.1} parent=27 // pred_check
          %p182 = pneg %p57
        $region30: #{tpu_custom_call.1} parent=27 // pred_check_branch
          %184 = sbr.rel (%p182) target = $region32
        $region31: #{tpu_custom_call.1} parent=27 // pred_region
          %186 = dma.done %s178, 128
        $region32: #{tpu_custom_call.1} parent=27 // pred_fallthru
          _
        %s187 = sand.u32 %s72, 1
        %s188 = scalar_lea.sflag [#allocation6], %s187
        %s189 = sand.u32 %s72, 1
        %s190 = smul.addr %s189, 8
        %s191 = scalar_lea.vmem [#allocation5], %s190
        // Predicated region
        $region33: #{tpu_custom_call.1} parent=27 // pred_check
          %p192 = pneg %p85
        $region34: #{tpu_custom_call.1} parent=27 // pred_check_branch
          %194 = sbr.rel (%p192) target = $region36
        $region35: #{tpu_custom_call.1} parent=27 // pred_region
          %196 = dma.done %s188, 128
        $region36: #{tpu_custom_call.1} parent=27 // pred_fallthru
          _
        %s197 = sand.u32 %s44, 1
        %s198 = scalar_lea.sflag [#allocation3], %s197
        %s199 = sand.u32 %s44, 1
        %s200 = smul.addr %s199, 8
        %s201 = scalar_lea.vmem [#allocation2], %s200
        %p202 = pneg %p57
        %p203 = pneg %p54
        %s204 = sand.u32 %s72, 1
        %s205 = scalar_lea.sflag [#allocation6], %s204
        %s206 = sand.u32 %s72, 1
        %s207 = smul.addr %s206, 8
        %s208 = scalar_lea.vmem [#allocation5], %s207
        %p209 = pneg %p85
        %p210 = pneg %p82
        %p211 = pneg %p111
        %p212 = pneg %p108
        %s213 = sand.u32 %s98, 1
        %s214 = scalar_lea.sflag [#allocation4], %s213
        %s215 = sand.u32 %s98, 1
        %s216 = smul.addr %s215, 8
        %s217 = scalar_lea.vmem [#allocation7], %s216
        %s218 = sadd.s32 %s26, %s27
        %s219 = sadd.s32 %s26, %s27
        %p220 = scmp.eq.s32.totalorder %s27, 0
        // Predicated region
        $region37: #{tpu_custom_call.1} parent=27 // pred_check
          %p221 = pneg %p220
        $region38: #{tpu_custom_call.1} parent=27 // pred_check_branch
          %223 = sbr.rel (%p221) target = $region40
        $region39: #{tpu_custom_call.1} parent=27 // pred_region
          %224 = vst [vmem:[%s217] sm:$0xff] 0.0
        $region40: #{tpu_custom_call.1} parent=27 // pred_fallthru
          _
        %v225 = vld [vmem:[%s181] sm:$0xff]
        %v226 = vld [vmem:[%s191] sm:$0xff]
        %v227 = vand.u32 2147483647, %v225
        %v228 = vsub.f32 0.0, %v227
        %v229 = vmul.f32 %v228, 1.442695
        %v230 = vpow.pop %v229
        %v231 = vmax.f32 %v225, 0.0
        %v232 = vmul.f32 %v225, %v226
        %v233 = vsub.f32 %v231, %v232
        %v234 = vadd.f32 %v230, 1.0
        %v235 = vlog2.pop %v234
        %v236 = vmul.f32 %v235, 0.6931472
        %v237 = vmul.f32 -0.5, %v230
        %v238 = vadd.f32 %v237, 1.0
        %v239 = vmul.f32 %v238, %v230
        %v240 = vand.u32 2147483647, %v230
        %vm241 = vcmp.lt.f32.partialorder %v240, 0.0004427343
        %v242 = vsel %vm241, %v239, %v236
        %v243 = vadd.f32 %v233, %v242
        %v244 = vmul.f32 %v225, 0.5
        %v245 = vtanh.pop %v244
        %v246 = vmul.f32 %v245, 0.5
        %v247 = vadd.f32 %v246, 0.5
        %v248 = vadd.f32 %v247, %v226
        %v249 = vmul.f32 %v247, 2.0
        %v250 = vmul.f32 %v249, %v226
        %v251 = vsub.f32 %v248, %v250
        %v252 = vmul.f32 %v251, %v251
        %v253 = vmul.f32 %v243, %v252
        %v254 = vld [vmem:[%s217] sm:$0xff]
        %v255 = vadd.f32 %v253, 0.0
        %v256 = vadd.f32 %v254, %v255
        %257 = vst [vmem:[%s217] sm:$0xff] %v256
        %s258 = sand.u32 %s98, 1
        %s259 = scalar_lea.sflag [#allocation4], %s258
        %s260 = sand.u32 %s98, 1
        %s261 = smul.addr %s260, 8
        %s262 = scalar_lea.vmem [#allocation7], %s261
        // Predicated region
        $region41: #{tpu_custom_call.1} parent=27 // pred_check
          %p263 = pneg %p108
        $region42: #{tpu_custom_call.1} parent=27 // pred_check_branch
          %265 = sbr.rel (%p263) target = $region44
        $region43: #{tpu_custom_call.1} parent=27 // pred_region
          %267 = vsyncadd %s259, 0
          %s268 = smul.addr %s26, 8
          %s269 = scalar_lea.hbm %s2, %s268
          %s271 = sshll.u32 %s262, 4
          %s272 = int_to_ptr.vmem [resolvable:$true] %s271
          %s273 = sshll.u32 %s269, 4
          %s274 = int_to_ptr.hbm [resolvable:$true] %s273
          %276 = dma.vmem_to_hbm [thread:$0]  %s272, 128, %s274, %s259
        $region44: #{tpu_custom_call.1} parent=27 // pred_fallthru
          _
      $region28: #{tpu_custom_call.1} parent=5 // pred_fallthru
        _
      %p277 = scmp.le.s32.totalorder 2, %s17
      // Predicated region
      $region45: #{tpu_custom_call.1} parent=5 // pred_check
        %p278 = pneg %p277
      $region46: #{tpu_custom_call.1} parent=5 // pred_check_branch
        %280 = sbr.rel (%p278) target = $region48
      $region47: #{tpu_custom_call.1} parent=5 // pred_region
        %s281 = ssub.s32 %s17, 2
        // Predicated region
        $region49: #{tpu_custom_call.1} parent=47 // pred_check
          %p282 = pneg %p114
        $region50: #{tpu_custom_call.1} parent=47 // pred_check_branch
          %284 = sbr.rel (%p282) target = $region52
        $region51: #{tpu_custom_call.1} parent=47 // pred_region
          %s285 = sand.u32 %s99, 1
          %s286 = scalar_lea.sflag [#allocation4], %s285
          %s287 = sand.u32 %s99, 1
          %s288 = smul.addr %s287, 8
          %s289 = scalar_lea.vmem [#allocation7], %s288
          %291 = dma.done %s286, 128
        $region52: #{tpu_custom_call.1} parent=47 // pred_fallthru
          _
      $region48: #{tpu_custom_call.1} parent=5 // pred_fallthru
        _
    $region6: #{tpu_custom_call.1} parent=1 // loop_footer
      %s21 = sadd.s32 1, %s17
    $region7: #{tpu_custom_call.1} parent=1 // loop_footer_branch
      %16 = sbr.rel target = $region3
    $region8: #{tpu_custom_call.1} parent=1 // loop_exit
      _
    %292 = vsyncpa [#allocation3], 1
    %s293 = scalar_lea.sflag [#allocation3], 1
    %294 = vsyncpa %s293, 1
    %295 = vsyncpa [#allocation6], 1
    %s296 = scalar_lea.sflag [#allocation6], 1
    %297 = vsyncpa %s296, 1
    %298 = vsyncpa [#allocation4], 1
    %s299 = scalar_lea.sflag [#allocation4], 1
    %300 = vsyncpa %s299, 1

</llo_original>
